<compile_context>
chip_gen: v5e
topology: v5e:2x2
jax: 0.10.0
libtpu: 0.0.40
codegen_flags: <defaults>
</compile_context>

<pallas_src>
import functools

import jax
import jax.numpy as jnp
from jax.experimental import pallas as pl
from jax.experimental.pallas import tpu as pltpu


def ca_layer_kernel(x_ref, w1_ref, b1_ref, w2_ref, b2_ref, o_ref, *, inv_hw):
    # x_ref: (Bt, C, HW) block -- channels on sublanes, spatial on lanes.
    x = x_ref[...].astype(jnp.float32)                       # (Bt, C, HW)

    # Global average pool over spatial positions: lane-axis sum * (1/HW).
    mean = jnp.sum(x, axis=2) * inv_hw                       # (Bt, C)

    # 1x1 conv C -> C//8 (+ bias), ReLU.
    h = jnp.dot(mean, w1_ref[...], preferred_element_type=jnp.float32)
    h = jnp.maximum(h + b1_ref[...], 0.0)                    # (Bt, Cr)

    # 1x1 conv C//8 -> C (+ bias), Sigmoid.
    s = jnp.dot(h, w2_ref[...], preferred_element_type=jnp.float32)
    s = jax.nn.sigmoid(s + b2_ref[...])                      # (Bt, C)

    # Channel-wise rescale, broadcast over the lane (HW) dimension.
    o_ref[...] = (x * s[:, :, None]).astype(o_ref.dtype)


def _pick_block_batch(n, c, hw, itemsize, target_bytes=4 << 20):
    """Largest divisor of n whose (Bt, C, HW) block stays <= target_bytes."""
    per_batch = c * hw * itemsize
    bt = max(1, min(n, target_bytes // max(per_batch, 1)))
    while n % bt != 0:
        bt -= 1
    return bt


def ca_layer(x_flat, w1, b1, w2, b2):
    """x_flat: (N, C, HW). Weights: w1 (C, Cr), b1 (1, Cr), w2 (Cr, C), b2 (1, C)."""
    N, C, HW = x_flat.shape
    Cr = w1.shape[1]
    itemsize = jnp.dtype(x_flat.dtype).itemsize

    bt = _pick_block_batch(N, C, HW, itemsize)
    grid = (N // bt,)

    block_bytes = bt * C * HW * itemsize
    # Double-buffered input + output blocks, plus small slack for weights.
    vmem_limit = int(min(32 << 20, max(16 << 20, 4 * block_bytes + (2 << 20))))

    kernel = functools.partial(ca_layer_kernel, inv_hw=1.0 / HW)

    return pl.pallas_call(
        kernel,
        out_shape=jax.ShapeDtypeStruct((N, C, HW), x_flat.dtype),
        grid_spec=pltpu.PrefetchScalarGridSpec(
            num_scalar_prefetch=0,
            grid=grid,
            in_specs=[
                pl.BlockSpec((bt, C, HW), lambda n: (n, 0, 0)),
                pl.BlockSpec((C, Cr), lambda n: (0, 0)),
                pl.BlockSpec((1, Cr), lambda n: (0, 0)),
                pl.BlockSpec((Cr, C), lambda n: (0, 0)),
                pl.BlockSpec((1, C), lambda n: (0, 0)),
            ],
            out_specs=pl.BlockSpec((bt, C, HW), lambda n: (n, 0, 0)),
        ),
        compiler_params=pltpu.CompilerParams(
            dimension_semantics=("parallel",),
            vmem_limit_bytes=vmem_limit,
        ),
    )(x_flat, w1, b1, w2, b2)


def ca_layer_nchw(x_nchw, w1, b1, w2, b2):
    """Wrapper matching PyTorch NCHW semantics (reshape only, no transpose)."""
    N, C, H, W = x_nchw.shape
    out_flat = ca_layer(x_nchw.reshape(N, C, H * W), w1, b1, w2, b2)
    return out_flat.reshape(N, C, H, W)


def _reference_nchw(x_nchw, w1, b1, w2, b2):
    # pure-JAX reference of the PyTorch forward
    y = jnp.mean(x_nchw.astype(jnp.float32), axis=(2, 3))    # (N, C)
    h = jnp.maximum(y @ w1 + b1[0], 0.0)                     # (N, Cr)
    s = jax.nn.sigmoid(h @ w2 + b2[0])                       # (N, C)
    return x_nchw.astype(jnp.float32) * s[:, :, None, None]


if __name__ == "__main__":
    # small deterministic setup: N=2, C=32 (so C//8 = 4), H=W=16  (HW = 256)
    N, C, H, W = 2, 32, 16, 16
    Cr = C // 8

    key = jax.random.PRNGKey(0)
    kx, k1, k2, k3, k4 = jax.random.split(key, 5)

    x = jax.random.normal(kx, (N, C, H, W), dtype=jnp.float32)

    # 1x1 conv weights: PyTorch stores (out, in, 1, 1); we keep them as
    # (in, out) matrices since a 1x1 conv on a 1x1 map is a matmul.
    w1 = jax.random.normal(k1, (C, Cr), dtype=jnp.float32) * 0.1
    b1 = jax.random.normal(k2, (1, Cr), dtype=jnp.float32) * 0.1
    w2 = jax.random.normal(k3, (Cr, C), dtype=jnp.float32) * 0.1
    b2 = jax.random.normal(k4, (1, C), dtype=jnp.float32) * 0.1

    # f32 I/O path (exact check vs. reference)
    out = jax.block_until_ready(ca_layer_nchw(x, w1, b1, w2, b2))
    ref = _reference_nchw(x, w1, b1, w2, b2)
    assert out.shape == (N, C, H, W)
    assert jnp.allclose(out, ref, atol=1e-5, rtol=1e-5), "f32 mismatch vs reference"

    # bf16 I/O path (halves HBM traffic; compute stays f32 in-kernel)
    x_bf16 = x.astype(jnp.bfloat16)
    out_bf16 = jax.block_until_ready(ca_layer_nchw(x_bf16, w1, b1, w2, b2))
    ref_bf16 = _reference_nchw(x_bf16, w1, b1, w2, b2)
    assert out_bf16.dtype == jnp.bfloat16
    assert jnp.allclose(out_bf16.astype(jnp.float32), ref_bf16,
                        atol=5e-2, rtol=5e-2), "bf16 mismatch vs reference"

    print("KERNEL_OK")
</pallas_src>

<mosaic_0001>
module attributes {stable_mosaic.version = 11 : i64} {
  func.func @ca_layer_kernel(%arg0: i32, %arg1: memref<2x32x256xf32, #tpu.memory_space<vmem>>, %arg2: memref<32x4xf32, #tpu.memory_space<vmem>>, %arg3: memref<1x4xf32, #tpu.memory_space<vmem>>, %arg4: memref<4x32xf32, #tpu.memory_space<vmem>>, %arg5: memref<1x32xf32, #tpu.memory_space<vmem>>, %arg6: memref<2x32x256xf32, #tpu.memory_space<vmem>>) attributes {dimension_semantics = [#tpu.dimension_semantics<parallel>], iteration_bounds = array<i64: 1>, scalar_prefetch = 0 : i64, scratch_operands = 0 : i64, tpu.core_type = #tpu.core_type<tc>, window_params = [{transform_indices = @transform_0, window_bounds = array<i64: 2, 32, 256>}, {pipeline_mode = #tpu.pipeline_mode<synchronous>, transform_indices = @transform_1, window_bounds = array<i64: 32, 4>}, {pipeline_mode = #tpu.pipeline_mode<synchronous>, transform_indices = @transform_2, window_bounds = array<i64: 1, 4>}, {pipeline_mode = #tpu.pipeline_mode<synchronous>, transform_indices = @transform_3, window_bounds = array<i64: 4, 32>}, {pipeline_mode = #tpu.pipeline_mode<synchronous>, transform_indices = @transform_4, window_bounds = array<i64: 1, 32>}, {transform_indices = @transform_5, window_bounds = array<i64: 2, 32, 256>}]} {
    %c0 = arith.constant 0 : index
    %c0_0 = arith.constant 0 : index
    %c0_1 = arith.constant 0 : index
    %0 = vector.load %arg1[%c0, %c0_0, %c0_1] : memref<2x32x256xf32, #tpu.memory_space<vmem>>, vector<2x32x256xf32>
    %cst = arith.constant dense<0.000000e+00> : vector<2x32xf32>
    %1 = vector.multi_reduction <add>, %0, %cst [2] : vector<2x32x256xf32> to vector<2x32xf32>
    %cst_2 = arith.constant 3.906250e-03 : f32
    %2 = vector.broadcast %cst_2 : f32 to vector<2x32xf32>
    %3 = arith.mulf %1, %2 : vector<2x32xf32>
    %c0_3 = arith.constant 0 : index
    %c0_4 = arith.constant 0 : index
    %4 = vector.load %arg2[%c0_3, %c0_4] : memref<32x4xf32, #tpu.memory_space<vmem>>, vector<32x4xf32>
    %cst_5 = arith.constant dense<0.000000e+00> : vector<2x4xf32>
    %5 = tpu.matmul %3, %4, %cst_5 {dimension_numbers = #tpu.dot_dimension_numbers<[1], [0], [0], [1], [0, 0, 1, 1], [], []>} : vector<2x32xf32>, vector<32x4xf32>, vector<2x4xf32> -> vector<2x4xf32>
    %c0_6 = arith.constant 0 : index
    %c0_7 = arith.constant 0 : index
    %6 = vector.load %arg3[%c0_6, %c0_7] : memref<1x4xf32, #tpu.memory_space<vmem>>, vector<1x4xf32>
    %7 = vector.broadcast %6 : vector<1x4xf32> to vector<2x4xf32>
    %8 = arith.addf %5, %7 : vector<2x4xf32>
    %cst_8 = arith.constant 0.000000e+00 : f32
    %9 = vector.broadcast %cst_8 : f32 to vector<2x4xf32>
    %10 = arith.maximumf %8, %9 : vector<2x4xf32>
    %c0_9 = arith.constant 0 : index
    %c0_10 = arith.constant 0 : index
    %11 = vector.load %arg4[%c0_9, %c0_10] : memref<4x32xf32, #tpu.memory_space<vmem>>, vector<4x32xf32>
    %cst_11 = arith.constant dense<0.000000e+00> : vector<2x32xf32>
    %12 = tpu.matmul %10, %11, %cst_11 {dimension_numbers = #tpu.dot_dimension_numbers<[1], [0], [0], [1], [0, 0, 1, 1], [], []>} : vector<2x4xf32>, vector<4x32xf32>, vector<2x32xf32> -> vector<2x32xf32>
    %c0_12 = arith.constant 0 : index
    %c0_13 = arith.constant 0 : index
    %13 = vector.load %arg5[%c0_12, %c0_13] : memref<1x32xf32, #tpu.memory_space<vmem>>, vector<1x32xf32>
    %14 = vector.broadcast %13 : vector<1x32xf32> to vector<2x32xf32>
    %15 = arith.addf %12, %14 : vector<2x32xf32>
    %16 = arith.negf %15 : vector<2x32xf32>
    %17 = math.exp %16 : vector<2x32xf32>
    %cst_14 = arith.constant 1.000000e+00 : f32
    %18 = vector.broadcast %cst_14 : f32 to vector<2x32xf32>
    %19 = arith.addf %18, %17 : vector<2x32xf32>
    %20 = arith.divf %18, %19 : vector<2x32xf32>
    %21 = vector.shape_cast %20 : vector<2x32xf32> to vector<2x32x1xf32>
    %22 = vector.broadcast %21 : vector<2x32x1xf32> to vector<2x32x256xf32>
    %23 = arith.mulf %0, %22 : vector<2x32x256xf32>
    %c0_15 = arith.constant 0 : index
    %c0_16 = arith.constant 0 : index
    %c0_17 = arith.constant 0 : index
    %24 = vector.load %arg6[%c0_15, %c0_16, %c0_17] : memref<2x32x256xf32, #tpu.memory_space<vmem>>, vector<2x32x256xf32>
    tpu.vector_store %arg6[%c0_15, %c0_16, %c0_17], %23 {strides = array<i32>} : memref<2x32x256xf32, #tpu.memory_space<vmem>>, vector<2x32x256xf32>,
    return
  }
  func.func @transform_0(%arg0: i32) -> (i32, i32, i32) {
    %c0_i32 = arith.constant 0 : i32
    %c0_i32_0 = arith.constant 0 : i32
    %c0_i32_1 = arith.constant 0 : i32
    return %arg0, %c0_i32, %c0_i32_0 : i32, i32, i32
  }
  func.func @transform_1(%arg0: i32) -> (i32, i32) {
    %c0_i32 = arith.constant 0 : i32
    %c0_i32_0 = arith.constant 0 : i32
    %c0_i32_1 = arith.constant 0 : i32
    return %c0_i32, %c0_i32_0 : i32, i32
  }
  func.func @transform_2(%arg0: i32) -> (i32, i32) {
    %c0_i32 = arith.constant 0 : i32
    %c0_i32_0 = arith.constant 0 : i32
    %c0_i32_1 = arith.constant 0 : i32
    return %c0_i32, %c0_i32_0 : i32, i32
  }
  func.func @transform_3(%arg0: i32) -> (i32, i32) {
    %c0_i32 = arith.constant 0 : i32
    %c0_i32_0 = arith.constant 0 : i32
    %c0_i32_1 = arith.constant 0 : i32
    return %c0_i32, %c0_i32_0 : i32, i32
  }
  func.func @transform_4(%arg0: i32) -> (i32, i32) {
    %c0_i32 = arith.constant 0 : i32
    %c0_i32_0 = arith.constant 0 : i32
    %c0_i32_1 = arith.constant 0 : i32
    return %c0_i32, %c0_i32_0 : i32, i32
  }
  func.func @transform_5(%arg0: i32) -> (i32, i32, i32) {
    %c0_i32 = arith.constant 0 : i32
    %c0_i32_0 = arith.constant 0 : i32
    %c0_i32_1 = arith.constant 0 : i32
    return %arg0, %c0_i32, %c0_i32_0 : i32, i32, i32
  }
}

</mosaic_0001>

<llo_original>
// kernel: tpu_custom_call.1
$region0: #{tpu_custom_call.1}
  #allocation0 [shape = 'u32[]', space=smem, size = 0x4, offset = 0x4, fixed_abs, tag = 'smem constant byte address 0x4 - core index']
  #allocation1 [shape = 'u32[72,128]{1,0:T(1,128)}', space=vmem, size = 0x9000, scoped, tag = 'internal scratch']
  %s0 = inlined_call_operand.hbm [shape: f32[2,32,256], index: 0, kind: input, shape index: {}]
  %s1 = inlined_call_operand.vmem [shape: f32[32,4], index: 1, kind: input, shape index: {}]
  %s2 = inlined_call_operand.vmem [shape: f32[1,4], index: 2, kind: input, shape index: {}]
  %s3 = inlined_call_operand.vmem [shape: f32[4,32], index: 3, kind: input, shape index: {}]
  %s4 = inlined_call_operand.vmem [shape: f32[1,32], index: 4, kind: input, shape index: {}]
  %s5 = inlined_call_operand.hbm [shape: f32[2,32,256], index: 5, kind: output, shape index: {}]
  %s6 = sld [smem:[#allocation0]]
  $region34: #{tpu_custom_call.1} parent=0
    _
  %s8 = ssub.s32 1, %s6
  %s9 = scalar_select 0, %s8, %s6
  $region1: #{tpu_custom_call.1} parent=0
    #allocation2 [shape = 'u8[65536]{0}', space=vmem, size = 0x10000, scoped, tag = 'input window, operand 0, single buffered']
    #allocation3 [shape = 's32[1]{0}', space=sflag, size = 0x4, scoped, tag = 'scoped memory for tpu_custom_call.1']
    #allocation4 [shape = 's32[1]{0}', space=sflag, size = 0x4, scoped, tag = 'scoped memory for tpu_custom_call.1']
    #allocation5 [shape = 'u8[65536]{0}', space=vmem, size = 0x10000, scoped, tag = 'output window, operand 0, single buffered']
    %10 = vsyncpa [#allocation3], 0
    %11 = vsyncpa [#allocation4], 0
    // Predicated region
    $region2: #{tpu_custom_call.1} parent=1 // pred_check
      _
    $region3: #{tpu_custom_call.1} parent=1 // pred_check_branch
      %13 = sbr.rel (0) target = $region5
    $region4: #{tpu_custom_call.1} parent=1 // pred_region
      %15 = vsyncadd [#allocation3], 0
      %s16 = sshll.u32 %s0, 4
      %s17 = int_to_ptr.hbm [resolvable:$true] %s16
      %s18 = sshll.u32 [#allocation2], 4
      %s19 = int_to_ptr.vmem [resolvable:$true] %s18
      %24 = dma.hbm_to_vmem [thread:$0]  %s17, 2048, %s19, [#allocation3], 256, 256, 16
    $region5: #{tpu_custom_call.1} parent=1 // pred_fallthru
      _
    // Predicated region
    $region6: #{tpu_custom_call.1} parent=1 // pred_check
      _
    $region7: #{tpu_custom_call.1} parent=1 // pred_check_branch
      %26 = sbr.rel (0) target = $region9
    $region8: #{tpu_custom_call.1} parent=1 // pred_region
      _
    $region9: #{tpu_custom_call.1} parent=1 // pred_fallthru
      _
    // Predicated region
    $region10: #{tpu_custom_call.1} parent=1 // pred_check
      _
    $region11: #{tpu_custom_call.1} parent=1 // pred_check_branch
      %28 = sbr.rel (0) target = $region13
    $region12: #{tpu_custom_call.1} parent=1 // pred_region
      _
    $region13: #{tpu_custom_call.1} parent=1 // pred_fallthru
      _
    // Predicated region
    $region14: #{tpu_custom_call.1} parent=1 // pred_check
      _
    $region15: #{tpu_custom_call.1} parent=1 // pred_check_branch
      %30 = sbr.rel (0) target = $region17
    $region16: #{tpu_custom_call.1} parent=1 // pred_region
      _
    $region17: #{tpu_custom_call.1} parent=1 // pred_fallthru
      _
    // Predicated region
    $region18: #{tpu_custom_call.1} parent=1 // pred_check
      _
    $region19: #{tpu_custom_call.1} parent=1 // pred_check_branch
      %32 = sbr.rel (0) target = $region21
    $region20: #{tpu_custom_call.1} parent=1 // pred_region
      _
    $region21: #{tpu_custom_call.1} parent=1 // pred_fallthru
      _
    // Predicated region
    $region22: #{tpu_custom_call.1} parent=1 // pred_check
      _
    $region23: #{tpu_custom_call.1} parent=1 // pred_check_branch
      %34 = sbr.rel (0) target = $region25
    $region24: #{tpu_custom_call.1} parent=1 // pred_region
      %36 = dma.done [#allocation3], 2048
    $region25: #{tpu_custom_call.1} parent=1 // pred_fallthru
      _
    %v37 = vld [vmem:[#allocation2] sm:$0xff]
    %v38 = vld [vmem:[#allocation2 + $0x8] sm:$0xff]
    %v39 = vld [vmem:[#allocation2 + $0x10] sm:$0xff]
    %v40 = vld [vmem:[#allocation2 + $0x18] sm:$0xff]
    %v41 = vld [vmem:[#allocation2 + $0x20] sm:$0xff]
    %v42 = vld [vmem:[#allocation2 + $0x28] sm:$0xff]
    %v43 = vld [vmem:[#allocation2 + $0x30] sm:$0xff]
    %v44 = vld [vmem:[#allocation2 + $0x38] sm:$0xff]
    %v45 = vld [vmem:[#allocation2 + $0x40] sm:$0xff]
    %v46 = vld [vmem:[#allocation2 + $0x48] sm:$0xff]
    %v47 = vld [vmem:[#allocation2 + $0x50] sm:$0xff]
    %v48 = vld [vmem:[#allocation2 + $0x58] sm:$0xff]
    %v49 = vld [vmem:[#allocation2 + $0x60] sm:$0xff]
    %v50 = vld [vmem:[#allocation2 + $0x68] sm:$0xff]
    %v51 = vld [vmem:[#allocation2 + $0x70] sm:$0xff]
    %v52 = vld [vmem:[#allocation2 + $0x78] sm:$0xff]
    %v53 = vadd.f32 %v37, %v38
    %54 = vadd.xlane.f32.xlu0 %v53
    %v55 = vpop.xlane.xlu0 %54
    %v56 = vadd.f32 %v39, %v40
    %57 = vadd.xlane.f32.xlu0 %v56
    %v58 = vpop.xlane.xlu0 %57
    %v59 = vadd.f32 %v41, %v42
    %60 = vadd.xlane.f32.xlu0 %v59
    %v61 = vpop.xlane.xlu0 %60
    %v62 = vadd.f32 %v43, %v44
    %63 = vadd.xlane.f32.xlu0 %v62
    %v64 = vpop.xlane.xlu0 %63
    %v65 = vadd.f32 %v45, %v46
    %66 = vadd.xlane.f32.xlu0 %v65
    %v67 = vpop.xlane.xlu0 %66
    %v68 = vadd.f32 %v47, %v48
    %69 = vadd.xlane.f32.xlu0 %v68
    %v70 = vpop.xlane.xlu0 %69
    %v71 = vadd.f32 %v49, %v50
    %72 = vadd.xlane.f32.xlu0 %v71
    %v73 = vpop.xlane.xlu0 %72
    %v74 = vadd.f32 %v51, %v52
    %75 = vadd.xlane.f32.xlu0 %v74
    %v76 = vpop.xlane.xlu0 %75
    %v77 = vmul.f32 %v55, 0.00390625
    %v78 = vmul.f32 %v58, 0.00390625
    %v79 = vmul.f32 %v61, 0.00390625
    %v80 = vmul.f32 %v64, 0.00390625
    %v81 = vmul.f32 %v67, 0.00390625
    %v82 = vmul.f32 %v70, 0.00390625
    %v83 = vmul.f32 %v73, 0.00390625
    %v84 = vmul.f32 %v76, 0.00390625
    %v85 = vld [vmem:[%s1] sm:$0xff]
    %v86 = vld [vmem:[%s1 + $0x8] sm:$0xff]
    %v87 = vld [vmem:[%s1 + $0x10] sm:$0xff]
    %v88 = vld [vmem:[%s1 + $0x18] sm:$0xff]
    %v89 = vld [vmem:[%s2] sm:$0x1]
    %v91 = vperm.slane %v89, 0
    %v101 = vlaneseq
    %v102 = vand.u32 %v101, 127
    %v103 = vperm.slane %v77, %v102
    %v104 = vadd.s32 %v102, 4294967288
    %v105 = vperm.slane %v78, %v104
    %vm106 = vcmask 130112
    %v107 = vsel %vm106, %v105, %v103
    %v108 = vadd.s32 %v102, 4294967280
    %v109 = vperm.slane %v79, %v108
    %vm110 = vcmask 195712
    %v111 = vsel %vm110, %v109, %v107
    %v112 = vadd.s32 %v102, 4294967272
    %v113 = vperm.slane %v80, %v112
    %vm114 = vcmask 261312
    %v115 = vsel %vm114, %v113, %v111
    %v116 = vperm.slane %v81, %v102
    %v117 = vperm.slane %v82, %v104
    %v118 = vsel %vm106, %v117, %v116
    %v119 = vperm.slane %v83, %v108
    %v120 = vsel %vm110, %v119, %v118
    %v121 = vperm.slane %v84, %v112
    %v122 = vsel %vm114, %v121, %v120
    %vm123 = vcmask 1041409
    %v124 = vsel %vm123, %v122, %v115
    %vm125 = vcmask 261120
    %v126 = vsel %vm125, %v124, 0
    %128 = vmatpush.msra.mxu0 0.0
    %129 = vmatpush.msra.mxu0 0.0
    %130 = vmatpush.msra.mxu0 0.0
    %131 = vmatpush.msra.mxu0 0.0
    %132 = vmatpush.msra.mxu0 0.0
    %133 = vmatpush.msra.mxu0 0.0
    %134 = vmatpush.msra.mxu0 0.0
    %135 = vmatpush.msra.mxu0 0.0
    %136 = vmatpush.msra.mxu0 0.0
    %137 = vmatpush.msra.mxu0 0.0
    %138 = vmatpush.msra.mxu0 0.0
    %139 = vmatpush.msra.mxu0 0.0
    %140 = vmatpush.msra.mxu0 %v88
    %141 = vmatpush.msra.mxu0 %v87
    %142 = vmatpush.msra.mxu0 %v86
    %143 = vmatpush.msra.mxu0 %v85
    %144 = vmatmul.f32.gmra.mxu0 %v126
    %v145 = vpop.f32.mrf.mxu0
    %v146 = vadd.f32 %v91, %v145
    %147 = vdwg.mxu0
    %v148 = vmax.f32 %v146, 0.0
    %v149 = vld [vmem:[%s3] sm:$0xf]
    %v150 = vld [vmem:[%s4] sm:$0x1]
    %v152 = vperm.slane %v150, 0
    %vm154 = vcmask 31744
    %v156 = vsel %vm154, %v148, 0
    %vm158 = vcmask 1043456
    %v160 = vsel %vm158, %v149, 0
    %162 = vmatpush.msra.mxu0 0.0
    %163 = vmatpush.msra.mxu0 0.0
    %164 = vmatpush.msra.mxu0 0.0
    %165 = vmatpush.msra.mxu0 0.0
    %166 = vmatpush.msra.mxu0 0.0
    %167 = vmatpush.msra.mxu0 0.0
    %168 = vmatpush.msra.mxu0 0.0
    %169 = vmatpush.msra.mxu0 0.0
    %170 = vmatpush.msra.mxu0 0.0
    %171 = vmatpush.msra.mxu0 0.0
    %172 = vmatpush.msra.mxu0 0.0
    %173 = vmatpush.msra.mxu0 0.0
    %174 = vmatpush.msra.mxu0 0.0
    %175 = vmatpush.msra.mxu0 0.0
    %176 = vmatpush.msra.mxu0 0.0
    %177 = vmatpush.msra.mxu0 %v160
    %178 = vmatmul.f32.gmra.mxu0 %v156
    %v179 = vpop.f32.mrf.mxu0
    %v180 = vadd.f32 %v152, %v179
    %181 = vdwg.mxu0
    %v182 = vxor.u32 %v180, 2147483648
    %v183 = vmul.f32 %v182, 1.442695
    %v184 = vpow.pop %v183
    %v185 = vadd.f32 %v184, 1.0
    %v186 = vrcp.pop %v185
    %v187 = vmul.f32 %v185, %v186
    %v188 = vsub.f32 1.0, %v187
    %v189 = vmul.f32 %v186, %v188
    %v190 = vadd.f32 %v186, %v189
    %vm191 = vweird.f32 %v185
    %vm192 = vweird.f32 %v186
    %vm193 = vmor %vm191, %vm192
    %v194 = vsel %vm193, %v186, %v190
    %v195 = vand.u32 2147483647, %v185
    %vm196 = vcmp.eq.f32.partialorder %v195, 8.507059e+37
    %v197 = vand.u32 %v185, 2147483648
    %v198 = vor.u32 1.1754944e-38, %v197
    %v199 = vsel %vm196, %v198, %v194
    %v200 = vmul.f32 1.0, %v199
    %v201 = vperm.slane %v200, 0
    %v202 = vlaneseq
    %v203 = vshrl.u32 %v202, 7
    %205 = vset.pattern.permute.xlu0 %v203
    %206 = vperm.xlu0 %205, %v201
    %v207 = vpop.permute.xlu0 %206
    %v208 = vlaneseq
    %v209 = vshrl.u32 %v208, 7
    %v210 = vadd.s32 %v209, 8
    %211 = vset.pattern.permute.xlu0 %v210
    %212 = vperm.xlu0 %211, %v201
    %v213 = vpop.permute.xlu0 %212
    %v214 = vlaneseq
    %v215 = vshrl.u32 %v214, 7
    %v216 = vadd.s32 %v215, 16
    %217 = vset.pattern.permute.xlu0 %v216
    %218 = vperm.xlu0 %217, %v201
    %v219 = vpop.permute.xlu0 %218
    %v220 = vlaneseq
    %v221 = vshrl.u32 %v220, 7
    %v222 = vadd.s32 %v221, 24
    %223 = vset.pattern.permute.xlu0 %v222
    %224 = vperm.xlu0 %223, %v201
    %v225 = vpop.permute.xlu0 %224
    %v226 = vperm.slane %v200, 1
    %v227 = vlaneseq
    %v228 = vshrl.u32 %v227, 7
    %230 = vset.pattern.permute.xlu0 %v228
    %231 = vperm.xlu0 %230, %v226
    %v232 = vpop.permute.xlu0 %231
    %v233 = vlaneseq
    %v234 = vshrl.u32 %v233, 7
    %v235 = vadd.s32 %v234, 8
    %236 = vset.pattern.permute.xlu0 %v235
    %237 = vperm.xlu0 %236, %v226
    %v238 = vpop.permute.xlu0 %237
    %v239 = vlaneseq
    %v240 = vshrl.u32 %v239, 7
    %v241 = vadd.s32 %v240, 16
    %242 = vset.pattern.permute.xlu0 %v241
    %243 = vperm.xlu0 %242, %v226
    %v244 = vpop.permute.xlu0 %243
    %v245 = vlaneseq
    %v246 = vshrl.u32 %v245, 7
    %v247 = vadd.s32 %v246, 24
    %248 = vset.pattern.permute.xlu0 %v247
    %249 = vperm.xlu0 %248, %v226
    %v250 = vpop.permute.xlu0 %249
    %v251 = vmul.f32 %v37, %v207
    %v252 = vmul.f32 %v38, %v207
    %v253 = vmul.f32 %v39, %v213
    %v254 = vmul.f32 %v40, %v213
    %v255 = vmul.f32 %v41, %v219
    %v256 = vmul.f32 %v42, %v219
    %v257 = vmul.f32 %v43, %v225
    %v258 = vmul.f32 %v44, %v225
    %v259 = vmul.f32 %v45, %v232
    %v260 = vmul.f32 %v46, %v232
    %v261 = vmul.f32 %v47, %v238
    %v262 = vmul.f32 %v48, %v238
    %v263 = vmul.f32 %v49, %v244
    %v264 = vmul.f32 %v50, %v244
    %v265 = vmul.f32 %v51, %v250
    %v266 = vmul.f32 %v52, %v250
    %267 = vst [vmem:[#allocation5] sm:$0xff] %v251
    %268 = vst [vmem:[#allocation5 + $0x8] sm:$0xff] %v252
    %269 = vst [vmem:[#allocation5 + $0x10] sm:$0xff] %v253
    %270 = vst [vmem:[#allocation5 + $0x18] sm:$0xff] %v254
    %271 = vst [vmem:[#allocation5 + $0x20] sm:$0xff] %v255
    %272 = vst [vmem:[#allocation5 + $0x28] sm:$0xff] %v256
    %273 = vst [vmem:[#allocation5 + $0x30] sm:$0xff] %v257
    %274 = vst [vmem:[#allocation5 + $0x38] sm:$0xff] %v258
    %275 = vst [vmem:[#allocation5 + $0x40] sm:$0xff] %v259
    %276 = vst [vmem:[#allocation5 + $0x48] sm:$0xff] %v260
    %277 = vst [vmem:[#allocation5 + $0x50] sm:$0xff] %v261
    %278 = vst [vmem:[#allocation5 + $0x58] sm:$0xff] %v262
    %279 = vst [vmem:[#allocation5 + $0x60] sm:$0xff] %v263
    %280 = vst [vmem:[#allocation5 + $0x68] sm:$0xff] %v264
    %281 = vst [vmem:[#allocation5 + $0x70] sm:$0xff] %v265
    %282 = vst [vmem:[#allocation5 + $0x78] sm:$0xff] %v266
    // Predicated region
    $region26: #{tpu_custom_call.1} parent=1 // pred_check
      _
    $region27: #{tpu_custom_call.1} parent=1 // pred_check_branch
      %284 = sbr.rel (0) target = $region29
    $region28: #{tpu_custom_call.1} parent=1 // pred_region
      %286 = vsyncadd [#allocation4], 0
      %s287 = sshll.u32 [#allocation5], 4
      %s288 = int_to_ptr.vmem [resolvable:$true] %s287
      %s289 = sshll.u32 %s5, 4
      %s290 = int_to_ptr.hbm [resolvable:$true] %s289
      %295 = dma.vmem_to_hbm [thread:$0]  %s288, 2048, %s290, [#allocation4], 256, 256, 16
    $region29: #{tpu_custom_call.1} parent=1 // pred_fallthru
      _
    // Predicated region
    $region30: #{tpu_custom_call.1} parent=1 // pred_check
      _
    $region31: #{tpu_custom_call.1} parent=1 // pred_check_branch
      %297 = sbr.rel (0) target = $region33
    $region32: #{tpu_custom_call.1} parent=1 // pred_region
      %299 = dma.done [#allocation4], 2048
    $region33: #{tpu_custom_call.1} parent=1 // pred_fallthru
      _
    %300 = vsyncpa [#allocation3], 1
    %301 = vsyncpa [#allocation4], 1

</llo_original>
